<compile_context>
chip_gen: v7x
topology: tpu7x:2x2x1
jax: 0.10.0
libtpu: 0.0.40
codegen_flags: <defaults>
</compile_context>

<pallas_src>
import math

import jax
import jax.numpy as jnp
from jax.experimental import pallas as pl
from jax.experimental.pallas import tpu as pltpu


# ---------------------------------------------------------------------------
# Pallas kernels
# ---------------------------------------------------------------------------
def _skip_eval_kernel(x_ref, y_ref, gamma_ref, o_ref):
    # x_ref, y_ref, o_ref : (TN, Fb)   gamma_ref : (L, Fb), L divides TN.
    g = gamma_ref[...]
    if g.shape[0] != 1 and g.shape[0] != x_ref.shape[0]:
        g = jnp.tile(g, (x_ref.shape[0] // g.shape[0], 1))
    o_ref[...] = (x_ref[...] * g + y_ref[...]).astype(o_ref.dtype)


def _skip_train_kernel(x_ref, y_ref, gamma_ref, scale_ref, o_ref):
    # scale_ref : (TN, 1) per-point scale, or (TN, 128/F) packed points per
    # lane-dense row (expanded in-kernel to full lane width).
    s = scale_ref[...]
    if s.shape[-1] not in (1, x_ref.shape[-1]):
        rep = x_ref.shape[-1] // s.shape[-1]   # = features per point
        s = jnp.repeat(s, rep, axis=-1)
    o_ref[...] = (x_ref[...] * gamma_ref[...] * s + y_ref[...]).astype(o_ref.dtype)


# ---------------------------------------------------------------------------
# Tiling helpers
# ---------------------------------------------------------------------------
_SUBLANE = 16  # safe sublane multiple for f32 and bf16


def _cdiv(a, b):
    return -(-a // b)


def _round_up(a, b):
    return _cdiv(a, b) * b


def _round_down(a, b):
    return (a // b) * b


def _chip_config():
    """Generation-aware block target / scoped-VMEM budget / megacore flag."""
    try:
        kind = jax.devices()[0].device_kind.lower()
    except Exception:  # pragma: no cover - defensive
        kind = ""
    if "7" in kind:
        # v7x: 2 TensorCores, 64 MiB physical VMEM, ~32 MiB default scoped.
        return {"target_block": 4 << 20,
                "vmem_budget": int(0.75 * (32 << 20)),
                "multi_core": True}
    if "v6" in kind:
        # v6e: 1 TensorCore, 32 MiB default scoped VMEM.
        return {"target_block": 4 << 20,
                "vmem_budget": int(0.75 * (32 << 20)),
                "multi_core": False}
    # v5e / unknown: conservative (16 MiB default scoped VMEM, 1 TensorCore).
    return {"target_block": 2 << 20,
            "vmem_budget": int(0.75 * (16 << 20)),
            "multi_core": False}


def _pick_tile_rows(m_rows, f_lanes, itemsize, *, with_scale, row_align, cfg):
    """Rows per block for an (m_rows, f_lanes) streamed layout.

    Accounts for VMEM lane padding (blocks pad the lane dim to a multiple of
    128), double buffering of x/y/out and, in training, the per-point scale
    stream (which always costs a full 128-lane row in VMEM).
    """
    lanes_pad = _round_up(f_lanes, 128)
    data_row = lanes_pad * itemsize                     # per stream (x, y, out)
    scale_row = 128 * itemsize if with_scale else 0     # lane-padded scale
    vmem_per_row = 2 * (3 * data_row + scale_row)       # double-buffered total

    rows = max(1, cfg["target_block"] // data_row)            # ~target per stream
    rows = min(rows, max(1, cfg["vmem_budget"] // vmem_per_row))
    rows = max(row_align, _round_down(rows, row_align))

    if not cfg["multi_core"]:
        # Single TensorCore: never force a split; one block for small inputs.
        return min(rows, _round_up(m_rows, row_align))

    # v7x megacore: tiny inputs -> single step; otherwise aim for an even
    # number of comparable steps so both TensorCores get balanced work.
    total_bytes = 3 * m_rows * f_lanes * itemsize
    if total_bytes < (1 << 20):
        return min(rows, _round_up(m_rows, row_align))
    steps = _cdiv(m_rows, rows)
    if steps < 2:
        steps = 2
    elif steps % 2 == 1:
        steps += 1
    return max(row_align, _round_up(_cdiv(m_rows, steps), row_align))


def _lane_dense_plan(n, f):
    """(m, L) for a free row-major repack (n, f) -> (m, 128) where the gamma
    pattern repeats every L rows, or None if not applicable/worthwhile."""
    if f % 128 == 0:
        return None                      # already lane dense as (n, f)
    if (n * f) % 128 != 0:
        return None                      # repack would not be a free reshape
    L = (f * 128 // math.gcd(f, 128)) // 128
    if L > 8:
        return None                      # gamma pattern too long to bother
    return (n * f) // 128, L


# ---------------------------------------------------------------------------
# pallas_call wrappers
# ---------------------------------------------------------------------------
def _run_eval(x, y, gamma2, tile_n):
    m, f = x.shape
    L = gamma2.shape[0]
    return pl.pallas_call(
        _skip_eval_kernel,
        out_shape=jax.ShapeDtypeStruct((m, f), x.dtype),
        grid_spec=pltpu.PrefetchScalarGridSpec(
            num_scalar_prefetch=0,
            grid=(_cdiv(m, tile_n),),
            in_specs=[
                pl.BlockSpec((tile_n, f), lambda i: (i, 0)),   # x
                pl.BlockSpec((tile_n, f), lambda i: (i, 0)),   # y
                pl.BlockSpec((L, f), lambda i: (0, 0)),        # gamma (resident)
            ],
            out_specs=pl.BlockSpec((tile_n, f), lambda i: (i, 0)),
        ),
        compiler_params=pltpu.CompilerParams(
            dimension_semantics=("parallel",)),
    )(x, y, gamma2)


def _run_train(x, y, gamma2, scale2, tile_n):
    m, f = x.shape
    L = gamma2.shape[0]
    sw = scale2.shape[1]
    return pl.pallas_call(
        _skip_train_kernel,
        out_shape=jax.ShapeDtypeStruct((m, f), x.dtype),
        grid_spec=pltpu.PrefetchScalarGridSpec(
            num_scalar_prefetch=0,
            grid=(_cdiv(m, tile_n),),
            in_specs=[
                pl.BlockSpec((tile_n, f), lambda i: (i, 0)),   # x
                pl.BlockSpec((tile_n, f), lambda i: (i, 0)),   # y
                pl.BlockSpec((L, f), lambda i: (0, 0)),        # gamma (resident)
                pl.BlockSpec((tile_n, sw), lambda i: (i, 0)),  # per-point scale
            ],
            out_specs=pl.BlockSpec((tile_n, f), lambda i: (i, 0)),
        ),
        compiler_params=pltpu.CompilerParams(
            dimension_semantics=("parallel",)),
    )(x, y, gamma2, scale2)


# ---------------------------------------------------------------------------
# Public hot paths
# ---------------------------------------------------------------------------
def skip_connection_eval(p_x, p_y, gamma):
    """Eval-mode: out = x * gamma + y (lane-dense whenever possible)."""
    n, f = p_x.shape
    cfg = _chip_config()
    gamma = gamma.astype(p_x.dtype)
    itemsize = jnp.dtype(p_x.dtype).itemsize

    plan = _lane_dense_plan(n, f)
    if plan is not None:
        m, L = plan
        x2 = p_x.reshape(m, 128)
        y2 = p_y.reshape(m, 128)
        reps = (L * 128) // f
        g2 = jnp.tile(gamma.reshape(1, f), (1, reps)).reshape(L, 128)
        row_align = (_SUBLANE * L) // math.gcd(_SUBLANE, L)
        tile_n = _pick_tile_rows(m, 128, itemsize, with_scale=False,
                                 row_align=row_align, cfg=cfg)
        return _run_eval(x2, y2, g2, tile_n).reshape(n, f)

    # F % 128 == 0 is already lane-dense as (N, F); other F fall back
    # (masked lane stores, still correct).
    tile_n = _pick_tile_rows(n, f, itemsize, with_scale=False,
                             row_align=_SUBLANE, cfg=cfg)
    return _run_eval(p_x, p_y, gamma, tile_n)


def skip_connection_train(p_x, p_y, gamma, point_scale):
    """Training: out = x * gamma * scale + y, scale is (N, 1) per point."""
    n, f = p_x.shape
    cfg = _chip_config()
    dt = p_x.dtype
    gamma = gamma.astype(dt)
    point_scale = point_scale.astype(dt).reshape(n, 1)
    itemsize = jnp.dtype(dt).itemsize

    plan = _lane_dense_plan(n, f)
    if plan is not None and plan[1] == 1:
        # 128 % F == 0: each repacked 128-lane row holds whole points.
        m = plan[0]
        ppr = 128 // f                                  # points per row
        x2 = p_x.reshape(m, 128)
        y2 = p_y.reshape(m, 128)
        g2 = jnp.tile(gamma.reshape(1, f), (1, ppr))    # (1, 128)
        s2 = point_scale.reshape(m, ppr)                # packed point scales
        tile_n = _pick_tile_rows(m, 128, itemsize, with_scale=True,
                                 row_align=_SUBLANE, cfg=cfg)
        return _run_train(x2, y2, g2, s2, tile_n).reshape(n, f)

    tile_n = _pick_tile_rows(n, f, itemsize, with_scale=True,
                             row_align=_SUBLANE, cfg=cfg)
    return _run_train(p_x, p_y, gamma, point_scale, tile_n)


# ---------------------------------------------------------------------------
# SkipConnection module (parameters + DropPathPC glue in plain JAX)
# ---------------------------------------------------------------------------
class SkipConnection:
    def __init__(self, p_drop_prob, p_num_features, p_init_gamma=1e-6,
                 dtype=jnp.float32):
        self.drop_prob = float(p_drop_prob)
        # Matches torch init: p_init_gamma * ones((1, F)).
        self.gamma = p_init_gamma * jnp.ones((1, p_num_features), dtype=dtype)

    def __call__(self, p_x, p_y, batch_ids, num_batches, *,
                 training=False, rng_key=None):
        if training and self.drop_prob > 0.0:
            assert rng_key is not None
            keep_prob = 1.0 - self.drop_prob
            # One Bernoulli draw per point cloud (stochastic depth), mapped to
            # points via batch_ids.  This tiny mask + gather stays in JAX.
            keep = jax.random.bernoulli(rng_key, keep_prob, (num_batches,))
            keep_scale = keep.astype(p_x.dtype) / jnp.asarray(keep_prob,
                                                              p_x.dtype)
            point_scale = keep_scale[batch_ids][:, None]          # (N, 1)
            return skip_connection_train(p_x, p_y, self.gamma, point_scale)
        # Eval / drop_prob == 0: DropPathPC is identity -> no scale stream.
        return skip_connection_eval(p_x, p_y, self.gamma)


# ---------------------------------------------------------------------------
# Demo / correctness check
# ---------------------------------------------------------------------------
if __name__ == "__main__":
    key = jax.random.PRNGKey(0)
    kx, ky, kdrop, kx2, ky2, kx3, ky3, kdrop2 = jax.random.split(key, 8)

    # ---- main case: F=32 (lane-dense repack, L=1), f32 --------------------
    N_POINTS, NUM_FEATURES, NUM_BATCHES = 256, 32, 4
    p_x = jax.random.normal(kx, (N_POINTS, NUM_FEATURES), dtype=jnp.float32)
    p_y = jax.random.normal(ky, (N_POINTS, NUM_FEATURES), dtype=jnp.float32)
    batch_ids = jnp.repeat(jnp.arange(NUM_BATCHES, dtype=jnp.int32),
                           N_POINTS // NUM_BATCHES)

    layer = SkipConnection(p_drop_prob=0.2, p_num_features=NUM_FEATURES,
                           p_init_gamma=1e-6)

    # eval mode (DropPathPC identity)
    out_eval = jax.block_until_ready(
        layer(p_x, p_y, batch_ids, NUM_BATCHES, training=False))
    ref_eval = p_x * layer.gamma + p_y
    assert jnp.allclose(out_eval, ref_eval, atol=1e-6, rtol=1e-6)

    # training mode (per-cloud stochastic depth, lane-dense packed scale)
    out_train = jax.block_until_ready(
        layer(p_x, p_y, batch_ids, NUM_BATCHES, training=True, rng_key=kdrop))
    keep_prob = 1.0 - layer.drop_prob
    keep = jax.random.bernoulli(kdrop, keep_prob, (NUM_BATCHES,))
    keep_scale = keep.astype(jnp.float32) / jnp.asarray(keep_prob, jnp.float32)
    ref_train = (p_x * layer.gamma) * keep_scale[batch_ids][:, None] + p_y
    assert jnp.allclose(out_train, ref_train, atol=1e-6, rtol=1e-6)

    # ---- F=96: generalized lane-dense eval repack (L=3) --------------------
    N2, F2 = 100, 96
    q_x = jax.random.normal(kx2, (N2, F2), dtype=jnp.float32)
    q_y = jax.random.normal(ky2, (N2, F2), dtype=jnp.float32)
    layer2 = SkipConnection(p_drop_prob=0.0, p_num_features=F2,
                            p_init_gamma=1e-6)
    out2 = jax.block_until_ready(layer2(q_x, q_y, None, 1, training=False))
    ref2 = q_x * layer2.gamma + q_y
    assert out2.shape == (N2, F2)
    assert jnp.allclose(out2, ref2, atol=1e-6, rtol=1e-6)

    # ---- F=96 training fallback ((N,1) scale, VMEM-budgeted lane padding) --
    NUM_BATCHES3 = 5
    batch_ids3 = jnp.repeat(jnp.arange(NUM_BATCHES3, dtype=jnp.int32),
                            N2 // NUM_BATCHES3)
    layer3 = SkipConnection(p_drop_prob=0.3, p_num_features=F2,
                            p_init_gamma=1e-6)
    out3 = jax.block_until_ready(
        layer3(q_x, q_y, batch_ids3, NUM_BATCHES3, training=True,
               rng_key=kdrop2))
    keep3 = jax.random.bernoulli(kdrop2, 1.0 - layer3.drop_prob,
                                 (NUM_BATCHES3,))
    ks3 = keep3.astype(jnp.float32) / jnp.asarray(1.0 - layer3.drop_prob,
                                                  jnp.float32)
    ref3 = (q_x * layer3.gamma) * ks3[batch_ids3][:, None] + q_y
    assert jnp.allclose(out3, ref3, atol=1e-6, rtol=1e-6)

    # ---- ragged case: repack not a free reshape -> (N, F) fallback ---------
    N4, F4 = 101, 96
    r_x = jax.random.normal(kx3, (N4, F4), dtype=jnp.float32)
    r_y = jax.random.normal(ky3, (N4, F4), dtype=jnp.float32)
    layer4 = SkipConnection(p_drop_prob=0.0, p_num_features=F4,
                            p_init_gamma=1e-6)
    out4 = jax.block_until_ready(layer4(r_x, r_y, None, 1, training=False))
    ref4 = r_x * layer4.gamma + r_y
    assert out4.shape == (N4, F4)
    assert jnp.allclose(out4, ref4, atol=1e-6, rtol=1e-6)

    # ---- bf16 end-to-end (HBM-bandwidth bound -> half the bytes) -----------
    bx = p_x.astype(jnp.bfloat16)
    by = p_y.astype(jnp.bfloat16)
    out_bf16 = jax.block_until_ready(
        layer(bx, by, batch_ids, NUM_BATCHES, training=False))
    ref_bf16 = bx.astype(jnp.float32) * layer.gamma + by.astype(jnp.float32)
    assert out_bf16.dtype == jnp.bfloat16
    assert jnp.allclose(out_bf16.astype(jnp.float32), ref_bf16,
                        atol=3e-2, rtol=3e-2)

    print("KERNEL_OK")
</pallas_src>

<mosaic_0001>
module attributes {stable_mosaic.version = 11 : i64} {
  func.func @_skip_eval_kernel(%arg0: i32, %arg1: memref<64x128xf32, #tpu.memory_space<vmem>>, %arg2: memref<64x128xf32, #tpu.memory_space<vmem>>, %arg3: memref<1x128xf32, #tpu.memory_space<vmem>>, %arg4: memref<64x128xf32, #tpu.memory_space<vmem>>) attributes {dimension_semantics = [#tpu.dimension_semantics<parallel>], iteration_bounds = array<i64: 1>, scalar_prefetch = 0 : i64, scratch_operands = 0 : i64, tpu.core_type = #tpu.core_type<tc>, window_params = [{transform_indices = @transform_0, window_bounds = array<i64: 64, 128>}, {transform_indices = @transform_1, window_bounds = array<i64: 64, 128>}, {pipeline_mode = #tpu.pipeline_mode<synchronous>, transform_indices = @transform_2, window_bounds = array<i64: 1, 128>}, {transform_indices = @transform_3, window_bounds = array<i64: 64, 128>}]} {
    %c0 = arith.constant 0 : index
    %c0_0 = arith.constant 0 : index
    %0 = vector.load %arg3[%c0, %c0_0] : memref<1x128xf32, #tpu.memory_space<vmem>>, vector<1x128xf32>
    %c0_1 = arith.constant 0 : index
    %c0_2 = arith.constant 0 : index
    %1 = vector.load %arg1[%c0_1, %c0_2] : memref<64x128xf32, #tpu.memory_space<vmem>>, vector<64x128xf32>
    %2 = vector.broadcast %0 : vector<1x128xf32> to vector<64x128xf32>
    %3 = arith.mulf %1, %2 : vector<64x128xf32>
    %c0_3 = arith.constant 0 : index
    %c0_4 = arith.constant 0 : index
    %4 = vector.load %arg2[%c0_3, %c0_4] : memref<64x128xf32, #tpu.memory_space<vmem>>, vector<64x128xf32>
    %5 = arith.addf %3, %4 : vector<64x128xf32>
    %c0_5 = arith.constant 0 : index
    %c0_6 = arith.constant 0 : index
    %6 = vector.load %arg4[%c0_5, %c0_6] : memref<64x128xf32, #tpu.memory_space<vmem>>, vector<64x128xf32>
    tpu.vector_store %arg4[%c0_5, %c0_6], %5 {strides = array<i32>} : memref<64x128xf32, #tpu.memory_space<vmem>>, vector<64x128xf32>,
    return
  }
  func.func @transform_0(%arg0: i32) -> (i32, i32) {
    %c0_i32 = arith.constant 0 : i32
    %c0_i32_0 = arith.constant 0 : i32
    return %arg0, %c0_i32 : i32, i32
  }
  func.func @transform_1(%arg0: i32) -> (i32, i32) {
    %c0_i32 = arith.constant 0 : i32
    %c0_i32_0 = arith.constant 0 : i32
    return %arg0, %c0_i32 : i32, i32
  }
  func.func @transform_2(%arg0: i32) -> (i32, i32) {
    %c0_i32 = arith.constant 0 : i32
    %c0_i32_0 = arith.constant 0 : i32
    %c0_i32_1 = arith.constant 0 : i32
    return %c0_i32, %c0_i32_0 : i32, i32
  }
  func.func @transform_3(%arg0: i32) -> (i32, i32) {
    %c0_i32 = arith.constant 0 : i32
    %c0_i32_0 = arith.constant 0 : i32
    return %arg0, %c0_i32 : i32, i32
  }
}

</mosaic_0001>

<llo_original>
// kernel: tpu_custom_call.1
$region0: #{tpu_custom_call.1}
  #allocation0 [shape = 'u32[]', space=smem, size = 0x4, offset = 0x4, fixed_abs, tag = 'smem constant byte address 0x4 - core index']
  #allocation1 [shape = 'u32[144,128]{1,0:T(1,128)}', space=vmem, size = 0x12000, scoped, tag = 'internal scratch']
  %s0 = inlined_call_operand.hbm [shape: f32[64,128], index: 0, kind: input, shape index: {}]
  %s1 = inlined_call_operand.hbm [shape: f32[64,128], index: 1, kind: input, shape index: {}]
  %s2 = inlined_call_operand.vmem [shape: f32[1,128], index: 2, kind: input, shape index: {}]
  %s3 = inlined_call_operand.hbm [shape: f32[64,128], index: 3, kind: output, shape index: {}]
  %s4 = sld [smem:[#allocation0]]
  $region30: #{tpu_custom_call.1} parent=0
    _
  %s6 = ssub.s32 1, %s4
  %s7 = scalar_select 0, %s6, %s4
  $region1: #{tpu_custom_call.1} parent=0
    #allocation2 [shape = 'u8[32768]{0}', space=vmem, size = 0x8000, scoped, tag = 'input window, operand 0, single buffered']
    #allocation3 [shape = 's32[1]{0}', space=sflag, size = 0x4, scoped, tag = 'scoped memory for tpu_custom_call.1']
    #allocation4 [shape = 's32[1]{0}', space=sflag, size = 0x4, scoped, tag = 'scoped memory for tpu_custom_call.1']
    #allocation5 [shape = 'u8[32768]{0}', space=vmem, size = 0x8000, scoped, tag = 'input window, operand 1, single buffered']
    #allocation6 [shape = 's32[1]{0}', space=sflag, size = 0x4, scoped, tag = 'scoped memory for tpu_custom_call.1']
    #allocation7 [shape = 'u8[32768]{0}', space=vmem, size = 0x8000, scoped, tag = 'output window, operand 0, single buffered']
    %8 = vsyncpa [#allocation3], 0
    %9 = vsyncpa [#allocation6], 0
    %10 = vsyncpa [#allocation4], 0
    // Predicated region
    $region2: #{tpu_custom_call.1} parent=1 // pred_check
      _
    $region3: #{tpu_custom_call.1} parent=1 // pred_check_branch
      %12 = sbr.rel (0) target = $region5
    $region4: #{tpu_custom_call.1} parent=1 // pred_region
      %s14 = ssub.s32 1024, 1024
      %15 = vsyncadd [#allocation3], %s14
      %s16 = sshll.u32 [#allocation2], 4
      %s17 = int_to_ptr.vmem [resolvable:$true] %s16
      %22 = dma.hbm_to_vmem [thread:$0]  %s0, 1024, %s17, [#allocation3], 128, 128, 8
    $region5: #{tpu_custom_call.1} parent=1 // pred_fallthru
      _
    // Predicated region
    $region6: #{tpu_custom_call.1} parent=1 // pred_check
      _
    $region7: #{tpu_custom_call.1} parent=1 // pred_check_branch
      %24 = sbr.rel (0) target = $region9
    $region8: #{tpu_custom_call.1} parent=1 // pred_region
      %s26 = ssub.s32 1024, 1024
      %27 = vsyncadd [#allocation6], %s26
      %s28 = sshll.u32 [#allocation5], 4
      %s29 = int_to_ptr.vmem [resolvable:$true] %s28
      %34 = dma.hbm_to_vmem [thread:$0]  %s1, 1024, %s29, [#allocation6], 128, 128, 8
    $region9: #{tpu_custom_call.1} parent=1 // pred_fallthru
      _
    // Predicated region
    $region10: #{tpu_custom_call.1} parent=1 // pred_check
      _
    $region11: #{tpu_custom_call.1} parent=1 // pred_check_branch
      %36 = sbr.rel (0) target = $region13
    $region12: #{tpu_custom_call.1} parent=1 // pred_region
      _
    $region13: #{tpu_custom_call.1} parent=1 // pred_fallthru
      _
    // Predicated region
    $region14: #{tpu_custom_call.1} parent=1 // pred_check
      _
    $region15: #{tpu_custom_call.1} parent=1 // pred_check_branch
      %38 = sbr.rel (0) target = $region17
    $region16: #{tpu_custom_call.1} parent=1 // pred_region
      %39 = dma.done [#allocation3], 1024
    $region17: #{tpu_custom_call.1} parent=1 // pred_fallthru
      _
    // Predicated region
    $region18: #{tpu_custom_call.1} parent=1 // pred_check
      _
    $region19: #{tpu_custom_call.1} parent=1 // pred_check_branch
      %41 = sbr.rel (0) target = $region21
    $region20: #{tpu_custom_call.1} parent=1 // pred_region
      %42 = dma.done [#allocation6], 1024
    $region21: #{tpu_custom_call.1} parent=1 // pred_fallthru
      _
    %v43 = vld [vmem:[%s2] sm:$0x1]
    %v44 = vld [vmem:[#allocation2] sm:$0xff]
    %v45 = vld [vmem:[#allocation2 + $0x8] sm:$0xff]
    %v46 = vld [vmem:[#allocation2 + $0x10] sm:$0xff]
    %v47 = vld [vmem:[#allocation2 + $0x18] sm:$0xff]
    %v48 = vld [vmem:[#allocation2 + $0x20] sm:$0xff]
    %v49 = vld [vmem:[#allocation2 + $0x28] sm:$0xff]
    %v50 = vld [vmem:[#allocation2 + $0x30] sm:$0xff]
    %v51 = vld [vmem:[#allocation2 + $0x38] sm:$0xff]
    %v53 = vlaneseq
    %v54 = vshrl.u32 %v53, 7
    %v55 = vsub.s32 0, %v54
    %v56 = vrot.slane %v43, %v55
    %v58 = vmul.f32 %v44, %v56
    %v59 = vmul.f32 %v45, %v56
    %v60 = vmul.f32 %v46, %v56
    %v61 = vmul.f32 %v47, %v56
    %v62 = vmul.f32 %v48, %v56
    %v63 = vmul.f32 %v49, %v56
    %v64 = vmul.f32 %v50, %v56
    %v65 = vmul.f32 %v51, %v56
    %v66 = vld [vmem:[#allocation5] sm:$0xff]
    %v67 = vld [vmem:[#allocation5 + $0x8] sm:$0xff]
    %v68 = vld [vmem:[#allocation5 + $0x10] sm:$0xff]
    %v69 = vld [vmem:[#allocation5 + $0x18] sm:$0xff]
    %v70 = vld [vmem:[#allocation5 + $0x20] sm:$0xff]
    %v71 = vld [vmem:[#allocation5 + $0x28] sm:$0xff]
    %v72 = vld [vmem:[#allocation5 + $0x30] sm:$0xff]
    %v73 = vld [vmem:[#allocation5 + $0x38] sm:$0xff]
    %v74 = vadd.f32 %v58, %v66
    %v75 = vadd.f32 %v59, %v67
    %v76 = vadd.f32 %v60, %v68
    %v77 = vadd.f32 %v61, %v69
    %v78 = vadd.f32 %v62, %v70
    %v79 = vadd.f32 %v63, %v71
    %v80 = vadd.f32 %v64, %v72
    %v81 = vadd.f32 %v65, %v73
    %82 = vst [vmem:[#allocation7] sm:$0xff] %v74
    %83 = vst [vmem:[#allocation7 + $0x8] sm:$0xff] %v75
    %84 = vst [vmem:[#allocation7 + $0x10] sm:$0xff] %v76
    %85 = vst [vmem:[#allocation7 + $0x18] sm:$0xff] %v77
    %86 = vst [vmem:[#allocation7 + $0x20] sm:$0xff] %v78
    %87 = vst [vmem:[#allocation7 + $0x28] sm:$0xff] %v79
    %88 = vst [vmem:[#allocation7 + $0x30] sm:$0xff] %v80
    %89 = vst [vmem:[#allocation7 + $0x38] sm:$0xff] %v81
    // Predicated region
    $region22: #{tpu_custom_call.1} parent=1 // pred_check
      _
    $region23: #{tpu_custom_call.1} parent=1 // pred_check_branch
      %91 = sbr.rel (0) target = $region25
    $region24: #{tpu_custom_call.1} parent=1 // pred_region
      %s93 = ssub.s32 1024, 1024
      %94 = vsyncadd [#allocation4], %s93
      %s95 = sshll.u32 [#allocation7], 4
      %s96 = int_to_ptr.vmem [resolvable:$true] %s95
      %101 = dma.vmem_to_hbm [thread:$0]  %s96, 1024, %s3, [#allocation4], 128, 128, 8
    $region25: #{tpu_custom_call.1} parent=1 // pred_fallthru
      _
    // Predicated region
    $region26: #{tpu_custom_call.1} parent=1 // pred_check
      _
    $region27: #{tpu_custom_call.1} parent=1 // pred_check_branch
      %103 = sbr.rel (0) target = $region29
    $region28: #{tpu_custom_call.1} parent=1 // pred_region
      %104 = dma.done [#allocation4], 1024
    $region29: #{tpu_custom_call.1} parent=1 // pred_fallthru
      _
    %105 = vsyncpa [#allocation3], 1
    %106 = vsyncpa [#allocation6], 1
    %107 = vsyncpa [#allocation4], 1

</llo_original>
